<compile_context>
chip_gen: v7x
topology: tpu7x:2x2x1
jax: 0.10.0
libtpu: 0.0.40
codegen_flags: <defaults>
</compile_context>

<pallas_src>
import jax
import jax.numpy as jnp
from jax import lax
from jax.experimental import pallas as pl
from jax.experimental.pallas import tpu as pltpu


def _smoothness_kernel(d_ref, img_ref, sumx_ref, sumy_ref):
    # d_ref    : (1, Cd, H, W) VMEM block (one batch element)
    # img_ref  : (1, Ci, H, W) VMEM block
    # sumx_ref : (1, 1, 128)   per-batch partial sum of weighted |d/dx|
    # sumy_ref : (1, 1, 128)   per-batch partial sum of weighted |d/dy|
    d = d_ref[...].astype(jnp.float32)
    img = img_ref[...].astype(jnp.float32)
    _, Cd, H, W = d.shape

    # Per-(b, c) depth mean over the full (H, W) slab and normalization
    # (matches pred_depth.mean(2, True).mean(3, True)).
    depth_mean = jnp.mean(d, axis=(2, 3), keepdims=True)        # (1, Cd, 1, 1)
    dn = d / (depth_mean + 1e-07)

    # Neighbor values via XLU rotations (roll by -1 == roll by N-1):
    #   axis=3 (lane axis, W)  -> x neighbor
    #   axis=2 (sublane axis, H) -> y neighbor
    dn_xn = pltpu.roll(dn, W - 1, 3)        # dn[..., h, (w+1) mod W]
    dn_yn = pltpu.roll(dn, H - 1, 2)        # dn[..., (h+1) mod H, w]
    img_xn = pltpu.roll(img, W - 1, 3)
    img_yn = pltpu.roll(img, H - 1, 2)

    grad_depth_x = jnp.abs(dn - dn_xn)      # (1, Cd, H, W); col W-1 is wrap -> masked
    grad_depth_y = jnp.abs(dn - dn_yn)      # (1, Cd, H, W); row H-1 is wrap -> masked

    # Image gradients, mean over channels, computed once per tile; exp goes to
    # the EUP slot.  Broadcast over Cd happens in the single multiply below.
    grad_image_x = jnp.mean(jnp.abs(img - img_xn), axis=1, keepdims=True)  # (1,1,H,W)
    grad_image_y = jnp.mean(jnp.abs(img - img_yn), axis=1, keepdims=True)  # (1,1,H,W)
    wx = jnp.exp(-grad_image_x)
    wy = jnp.exp(-grad_image_y)

    # Validity masks (no wrap-around columns/rows), built from iota -> no
    # shifted slices anywhere.
    col = lax.broadcasted_iota(jnp.int32, (1, 1, H, W), 3)
    row = lax.broadcasted_iota(jnp.int32, (1, 1, H, W), 2)

    sx = jnp.sum(jnp.where(col < W - 1, grad_depth_x * wx, 0.0))
    sy = jnp.sum(jnp.where(row < H - 1, grad_depth_y * wy, 0.0))

    sumx_ref[...] = jnp.full((1, 1, 128), sx, dtype=jnp.float32)
    sumy_ref[...] = jnp.full((1, 1, 128), sy, dtype=jnp.float32)


@jax.jit
def smoothness_loss(pred_depth, image):
    """Pallas implementation of SmoothnessLoss.forward. Returns a scalar f32."""
    B, Cd, H, W = pred_depth.shape
    Bi, Ci, Hi, Wi = image.shape
    assert (B, H, W) == (Bi, Hi, Wi)

    grid_spec = pltpu.PrefetchScalarGridSpec(
        num_scalar_prefetch=0,
        grid=(B,),
        in_specs=[
            pl.BlockSpec((1, Cd, H, W), lambda b: (b, 0, 0, 0)),
            pl.BlockSpec((1, Ci, H, W), lambda b: (b, 0, 0, 0)),
        ],
        out_specs=[
            pl.BlockSpec((1, 1, 128), lambda b: (b, 0, 0)),
            pl.BlockSpec((1, 1, 128), lambda b: (b, 0, 0)),
        ],
    )

    sum_x, sum_y = pl.pallas_call(
        _smoothness_kernel,
        grid_spec=grid_spec,
        out_shape=(
            jax.ShapeDtypeStruct((B, 1, 128), jnp.float32),
            jax.ShapeDtypeStruct((B, 1, 128), jnp.float32),
        ),
        compiler_params=pltpu.CompilerParams(
            # Batch axis is independent -> megacore split on v7x; default
            # scoped VMEM is plenty for per-batch (C, H, W) slabs on all gens.
            dimension_semantics=("parallel",),
        ),
    )(pred_depth, image)

    # Exact valid-element counts (mean over (B, Cd, H, W-1) and (B, Cd, H-1, W)).
    n_x = B * Cd * H * (W - 1)
    n_y = B * Cd * (H - 1) * W
    return jnp.sum(sum_x[:, 0, 0]) / n_x + jnp.sum(sum_y[:, 0, 0]) / n_y


def smoothness_loss_ref(pred_depth, image):
    """Pure-JAX reference mirroring the PyTorch module exactly."""
    d = pred_depth.astype(jnp.float32)
    img = image.astype(jnp.float32)
    depth_mean = jnp.mean(d, axis=(2, 3), keepdims=True)
    dn = d / (depth_mean + 1e-07)
    gdx = jnp.abs(dn[:, :, :, :-1] - dn[:, :, :, 1:])
    gdy = jnp.abs(dn[:, :, :-1, :] - dn[:, :, 1:, :])
    gix = jnp.mean(jnp.abs(img[:, :, :, :-1] - img[:, :, :, 1:]), axis=1, keepdims=True)
    giy = jnp.mean(jnp.abs(img[:, :, :-1, :] - img[:, :, 1:, :]), axis=1, keepdims=True)
    gdx = gdx * jnp.exp(-gix)
    gdy = gdy * jnp.exp(-giy)
    return jnp.mean(gdx) + jnp.mean(gdy)


if __name__ == "__main__":
    key = jax.random.PRNGKey(0)
    k1, k2 = jax.random.split(key)

    # Lane-dense demo shapes: W = 128 fills every vreg lane; H = 16 fills
    # sublanes.  Depth is 1-channel, image is 3-channel (as the module implies).
    B, Cd, Ci, H, W = 2, 1, 3, 16, 128
    pred_depth = jax.random.uniform(k1, (B, Cd, H, W), jnp.float32, minval=0.5, maxval=5.0)
    image = jax.random.uniform(k2, (B, Ci, H, W), jnp.float32, minval=0.0, maxval=1.0)

    loss = jax.block_until_ready(smoothness_loss(pred_depth, image))
    ref = jax.block_until_ready(smoothness_loss_ref(pred_depth, image))

    assert jnp.allclose(loss, ref, rtol=1e-5, atol=1e-6), (loss, ref)
    print("KERNEL_OK")
</pallas_src>

<mosaic_0001>
module attributes {stable_mosaic.version = 11 : i64} {
  func.func @_smoothness_kernel(%arg0: i32, %arg1: memref<1x1x16x128xf32, #tpu.memory_space<vmem>>, %arg2: memref<1x3x16x128xf32, #tpu.memory_space<vmem>>, %arg3: memref<1x1x128xf32, #tpu.memory_space<vmem>>, %arg4: memref<1x1x128xf32, #tpu.memory_space<vmem>>) attributes {dimension_semantics = [#tpu.dimension_semantics<parallel>], iteration_bounds = array<i64: 2>, scalar_prefetch = 0 : i64, scratch_operands = 0 : i64, tpu.core_type = #tpu.core_type<tc>, window_params = [{transform_indices = @transform_0, window_bounds = array<i64: 1, 1, 16, 128>}, {transform_indices = @transform_1, window_bounds = array<i64: 1, 3, 16, 128>}, {transform_indices = @transform_2, window_bounds = array<i64: 1, 1, 128>}, {transform_indices = @transform_3, window_bounds = array<i64: 1, 1, 128>}]} {
    %c0 = arith.constant 0 : index
    %c0_0 = arith.constant 0 : index
    %c0_1 = arith.constant 0 : index
    %c0_2 = arith.constant 0 : index
    %0 = vector.load %arg1[%c0, %c0_0, %c0_1, %c0_2] : memref<1x1x16x128xf32, #tpu.memory_space<vmem>>, vector<1x1x16x128xf32>
    %c0_3 = arith.constant 0 : index
    %c0_4 = arith.constant 0 : index
    %c0_5 = arith.constant 0 : index
    %c0_6 = arith.constant 0 : index
    %1 = vector.load %arg2[%c0_3, %c0_4, %c0_5, %c0_6] : memref<1x3x16x128xf32, #tpu.memory_space<vmem>>, vector<1x3x16x128xf32>
    %cst = arith.constant dense<0.000000e+00> : vector<1x1xf32>
    %2 = vector.multi_reduction <add>, %0, %cst [2, 3] : vector<1x1x16x128xf32> to vector<1x1xf32>
    %3 = vector.shape_cast %2 : vector<1x1xf32> to vector<1x1x1x1xf32>
    %cst_7 = arith.constant 2.048000e+03 : f32
    %4 = vector.broadcast %cst_7 : f32 to vector<1x1x1x1xf32>
    %5 = arith.divf %3, %4 : vector<1x1x1x1xf32>
    %cst_8 = arith.constant 1.000000e-07 : f32
    %6 = vector.broadcast %cst_8 : f32 to vector<1x1x1x1xf32>
    %7 = arith.addf %5, %6 : vector<1x1x1x1xf32>
    %8 = vector.broadcast %7 : vector<1x1x1x1xf32> to vector<1x1x16x128xf32>
    %9 = arith.divf %0, %8 : vector<1x1x16x128xf32>
    %c127_i32 = arith.constant 127 : i32
    %10 = tpu.dynamic_rotate %9 by %c127_i32 dim 3 : vector<1x1x16x128xf32>, i32 -> vector<1x1x16x128xf32>
    %c15_i32 = arith.constant 15 : i32
    %11 = tpu.dynamic_rotate %9 by %c15_i32 dim 2 : vector<1x1x16x128xf32>, i32 -> vector<1x1x16x128xf32>
    %c127_i32_9 = arith.constant 127 : i32
    %12 = tpu.dynamic_rotate %1 by %c127_i32_9 dim 3 : vector<1x3x16x128xf32>, i32 -> vector<1x3x16x128xf32>
    %c15_i32_10 = arith.constant 15 : i32
    %13 = tpu.dynamic_rotate %1 by %c15_i32_10 dim 2 : vector<1x3x16x128xf32>, i32 -> vector<1x3x16x128xf32>
    %14 = arith.subf %9, %10 : vector<1x1x16x128xf32>
    %15 = math.absf %14 : vector<1x1x16x128xf32>
    %16 = arith.subf %9, %11 : vector<1x1x16x128xf32>
    %17 = math.absf %16 : vector<1x1x16x128xf32>
    %18 = arith.subf %1, %12 : vector<1x3x16x128xf32>
    %19 = math.absf %18 : vector<1x3x16x128xf32>
    %cst_11 = arith.constant dense<0.000000e+00> : vector<1x16x128xf32>
    %20 = vector.multi_reduction <add>, %19, %cst_11 [1] : vector<1x3x16x128xf32> to vector<1x16x128xf32>
    %21 = vector.shape_cast %20 : vector<1x16x128xf32> to vector<1x1x16x128xf32>
    %cst_12 = arith.constant 3.000000e+00 : f32
    %22 = vector.broadcast %cst_12 : f32 to vector<1x1x16x128xf32>
    %23 = arith.divf %21, %22 : vector<1x1x16x128xf32>
    %24 = arith.subf %1, %13 : vector<1x3x16x128xf32>
    %25 = math.absf %24 : vector<1x3x16x128xf32>
    %cst_13 = arith.constant dense<0.000000e+00> : vector<1x16x128xf32>
    %26 = vector.multi_reduction <add>, %25, %cst_13 [1] : vector<1x3x16x128xf32> to vector<1x16x128xf32>
    %27 = vector.shape_cast %26 : vector<1x16x128xf32> to vector<1x1x16x128xf32>
    %cst_14 = arith.constant 3.000000e+00 : f32
    %28 = vector.broadcast %cst_14 : f32 to vector<1x1x16x128xf32>
    %29 = arith.divf %27, %28 : vector<1x1x16x128xf32>
    %cst_15 = arith.constant 0.000000e+00 : f32
    %30 = vector.broadcast %cst_15 : f32 to vector<1x1x16x128xf32>
    %31 = arith.subf %30, %23 : vector<1x1x16x128xf32>
    %32 = math.exp %31 : vector<1x1x16x128xf32>
    %cst_16 = arith.constant 0.000000e+00 : f32
    %33 = vector.broadcast %cst_16 : f32 to vector<1x1x16x128xf32>
    %34 = arith.subf %33, %29 : vector<1x1x16x128xf32>
    %35 = math.exp %34 : vector<1x1x16x128xf32>
    %36 = tpu.iota {dimensions = array<i32: 3>} : vector<1x1x16x128xi32>
    %37 = tpu.iota {dimensions = array<i32: 2>} : vector<1x1x16x128xi32>
    %c127_i32_17 = arith.constant 127 : i32
    %38 = vector.broadcast %c127_i32_17 : i32 to vector<1x1x16x128xi32>
    %39 = arith.cmpi slt, %36, %38 : vector<1x1x16x128xi32>
    %40 = arith.mulf %15, %32 : vector<1x1x16x128xf32>
    %cst_18 = arith.constant 0.000000e+00 : f32
    %41 = vector.broadcast %cst_18 : f32 to vector<1x1x16x128xf32>
    %42 = arith.select %39, %40, %41 : vector<1x1x16x128xi1>, vector<1x1x16x128xf32>
    %43 = vector.shape_cast %42 : vector<1x1x16x128xf32> to vector<1x1x1x16x128xf32>
    %cst_19 = arith.constant dense<0.000000e+00> : vector<1xf32>
    %44 = vector.multi_reduction <add>, %43, %cst_19 [1, 2, 3, 4] : vector<1x1x1x16x128xf32> to vector<1xf32>
    %45 = vector.shape_cast %44 : vector<1xf32> to vector<1x1x1x1x1xf32>
    %46 = vector.extract %45[0, 0, 0, 0, 0] : f32 from vector<1x1x1x1x1xf32>
    %c15_i32_20 = arith.constant 15 : i32
    %47 = vector.broadcast %c15_i32_20 : i32 to vector<1x1x16x128xi32>
    %48 = arith.cmpi slt, %37, %47 : vector<1x1x16x128xi32>
    %49 = arith.mulf %17, %35 : vector<1x1x16x128xf32>
    %cst_21 = arith.constant 0.000000e+00 : f32
    %50 = vector.broadcast %cst_21 : f32 to vector<1x1x16x128xf32>
    %51 = arith.select %48, %49, %50 : vector<1x1x16x128xi1>, vector<1x1x16x128xf32>
    %52 = vector.shape_cast %51 : vector<1x1x16x128xf32> to vector<1x1x1x16x128xf32>
    %cst_22 = arith.constant dense<0.000000e+00> : vector<1xf32>
    %53 = vector.multi_reduction <add>, %52, %cst_22 [1, 2, 3, 4] : vector<1x1x1x16x128xf32> to vector<1xf32>
    %54 = vector.shape_cast %53 : vector<1xf32> to vector<1x1x1x1x1xf32>
    %55 = vector.extract %54[0, 0, 0, 0, 0] : f32 from vector<1x1x1x1x1xf32>
    %56 = vector.broadcast %46 : f32 to vector<1x1x128xf32>
    %c0_23 = arith.constant 0 : index
    %c0_24 = arith.constant 0 : index
    %c0_25 = arith.constant 0 : index
    %57 = vector.load %arg3[%c0_23, %c0_24, %c0_25] : memref<1x1x128xf32, #tpu.memory_space<vmem>>, vector<1x1x128xf32>
    tpu.vector_store %arg3[%c0_23, %c0_24, %c0_25], %56 {strides = array<i32>} : memref<1x1x128xf32, #tpu.memory_space<vmem>>, vector<1x1x128xf32>,
    %58 = vector.broadcast %55 : f32 to vector<1x1x128xf32>
    %c0_26 = arith.constant 0 : index
    %c0_27 = arith.constant 0 : index
    %c0_28 = arith.constant 0 : index
    %59 = vector.load %arg4[%c0_26, %c0_27, %c0_28] : memref<1x1x128xf32, #tpu.memory_space<vmem>>, vector<1x1x128xf32>
    tpu.vector_store %arg4[%c0_26, %c0_27, %c0_28], %58 {strides = array<i32>} : memref<1x1x128xf32, #tpu.memory_space<vmem>>, vector<1x1x128xf32>,
    return
  }
  func.func @transform_0(%arg0: i32) -> (i32, i32, i32, i32) {
    %c0_i32 = arith.constant 0 : i32
    %c0_i32_0 = arith.constant 0 : i32
    %c0_i32_1 = arith.constant 0 : i32
    %c0_i32_2 = arith.constant 0 : i32
    return %arg0, %c0_i32, %c0_i32_0, %c0_i32_1 : i32, i32, i32, i32
  }
  func.func @transform_1(%arg0: i32) -> (i32, i32, i32, i32) {
    %c0_i32 = arith.constant 0 : i32
    %c0_i32_0 = arith.constant 0 : i32
    %c0_i32_1 = arith.constant 0 : i32
    %c0_i32_2 = arith.constant 0 : i32
    return %arg0, %c0_i32, %c0_i32_0, %c0_i32_1 : i32, i32, i32, i32
  }
  func.func @transform_2(%arg0: i32) -> (i32, i32, i32) {
    %c0_i32 = arith.constant 0 : i32
    %c0_i32_0 = arith.constant 0 : i32
    %c0_i32_1 = arith.constant 0 : i32
    return %arg0, %c0_i32, %c0_i32_0 : i32, i32, i32
  }
  func.func @transform_3(%arg0: i32) -> (i32, i32, i32) {
    %c0_i32 = arith.constant 0 : i32
    %c0_i32_0 = arith.constant 0 : i32
    %c0_i32_1 = arith.constant 0 : i32
    return %arg0, %c0_i32, %c0_i32_0 : i32, i32, i32
  }
}

</mosaic_0001>

<llo_original>
// kernel: smoothness_loss.1
$region0: #{smoothness_loss.1}
  #allocation0 [shape = 'u32[]', space=smem, size = 0x4, offset = 0x4, fixed_abs, tag = 'smem constant byte address 0x4 - core index']
  #allocation1 [shape = 'u32[144,128]{1,0:T(1,128)}', space=vmem, size = 0x12000, scoped, tag = 'internal scratch']
  %s0 = inlined_call_operand.hbm [shape: f32[2,1,16,128], index: 0, kind: input, shape index: {}]
  %s1 = inlined_call_operand.hbm [shape: f32[2,3,16,128], index: 1, kind: input, shape index: {}]
  %s2 = inlined_call_operand.vmem [shape: f32[2,1,128], index: 2, kind: output, shape index: {0}]
  %s3 = inlined_call_operand.vmem [shape: f32[2,1,128], index: 3, kind: output, shape index: {1}]
  %4 = xla_tuple %s2, %s3
  %s5 = sld [smem:[#allocation0]]
  $region57: #{smoothness_loss.1} parent=0
    _
  %s7 = ssub.s32 1, %s5
  %s8 = scalar_select 0, %s7, %s5
  $region1: #{smoothness_loss.1} parent=0
    #allocation2 [shape = 'u8[16384]{0}', space=vmem, size = 0x4000, scoped, tag = 'input window, operand 0']
    #allocation3 [shape = 's32[2]{0}', space=sflag, size = 0x8, scoped, tag = 'scoped memory for smoothness_loss.1']
    #allocation4 [shape = 'u8[49152]{0}', space=vmem, size = 0xc000, scoped, tag = 'input window, operand 1']
    #allocation5 [shape = 's32[2]{0}', space=sflag, size = 0x8, scoped, tag = 'scoped memory for smoothness_loss.1']
    %9 = vsyncpa [#allocation3], 0
    %s10 = scalar_lea.sflag [#allocation3], 1
    %11 = vsyncpa %s10, 0
    %12 = vsyncpa [#allocation5], 0
    %s13 = scalar_lea.sflag [#allocation5], 1
    %14 = vsyncpa %s13, 0
    loop: start=0, step=1, limit=4
    $region2: #{smoothness_loss.1} parent=1 // loop_pre_header
      _
    $region3: #{smoothness_loss.1} parent=1 // loop_header
      %s16 = sphi 0, %s20
      %p17 = scmp.ge.s32.totalorder %s16, 4
      %s26 = sphi 0, %s28
      %s29 = sphi 0, %s26
      %s30 = sphi 0, %s29
      %s46 = sphi 0, %s30
      %s52 = sphi 0, %s54
      %s55 = sphi 0, %s52
      %s56 = sphi 0, %s55
      %s72 = sphi 0, %s56
      %s78 = sphi 0, %s80
      %s81 = sphi 0, %s78
      %s82 = sphi 0, %s81
      %s98 = sphi 0, %s82
      %s104 = sphi 0, %s106
      %s107 = sphi 0, %s104
      %s108 = sphi 0, %s107
      %s124 = sphi 0, %s108
    $region4: #{smoothness_loss.1} parent=1 // loop_header_branch
      %19 = sbr.rel (%p17) target = $region8
    $region5: #{smoothness_loss.1} parent=1 // loop_body
      %s21 = ssub.s32 %s16, 1
      %s22 = ssub.s32 %s16, 2
      %s23 = sadd.s32 %s16, 1
      %s24 = ssub.s32 %s16, %s23
      %p25 = scmp.eq.s32.totalorder %s24, 0
      %s27 = sadd.s32 %s26, 1
      %s28 = scalar_select %p25, %s26, %s27
      %p31 = pneg %p25
      %p32 = scmp.eq.s32.totalorder %s16, 1
      %p33 = por %p31, %p32
      %p34 = scmp.ne.s32.totalorder %s26, %s29
      %p35 = scmp.eq.s32.totalorder %s16, 0
      %p36 = por %p34, %p35
      %p37 = scmp.ne.s32.totalorder %s26, %s29
      %p38 = scmp.eq.s32.totalorder %s21, 1
      %p39 = por %p37, %p38
      %p40 = scmp.ne.s32.totalorder %s29, %s30
      %p41 = scmp.eq.s32.totalorder %s21, 0
      %p42 = por %p40, %p41
      %p43 = scmp.ne.s32.totalorder %s29, %s30
      %p44 = scmp.eq.s32.totalorder %s22, 1
      %p45 = por %p43, %p44
      %p47 = scmp.ne.s32.totalorder %s30, %s46
      %p48 = scmp.eq.s32.totalorder %s22, 0
      %p49 = por %p47, %p48
      %s50 = ssub.s32 %s16, %s23
      %p51 = scmp.eq.s32.totalorder %s50, 0
      %s53 = sadd.s32 %s52, 1
      %s54 = scalar_select %p51, %s52, %s53
      %p57 = pneg %p51
      %p58 = scmp.eq.s32.totalorder %s16, 1
      %p59 = por %p57, %p58
      %p60 = scmp.ne.s32.totalorder %s52, %s55
      %p61 = scmp.eq.s32.totalorder %s16, 0
      %p62 = por %p60, %p61
      %p63 = scmp.ne.s32.totalorder %s52, %s55
      %p64 = scmp.eq.s32.totalorder %s21, 1
      %p65 = por %p63, %p64
      %p66 = scmp.ne.s32.totalorder %s55, %s56
      %p67 = scmp.eq.s32.totalorder %s21, 0
      %p68 = por %p66, %p67
      %p69 = scmp.ne.s32.totalorder %s55, %s56
      %p70 = scmp.eq.s32.totalorder %s22, 1
      %p71 = por %p69, %p70
      %p73 = scmp.ne.s32.totalorder %s56, %s72
      %p74 = scmp.eq.s32.totalorder %s22, 0
      %p75 = por %p73, %p74
      %s76 = ssub.s32 %s16, %s23
      %p77 = scmp.eq.s32.totalorder %s76, 0
      %s79 = sadd.s32 %s78, 1
      %s80 = scalar_select %p77, %s78, %s79
      %p83 = pneg %p77
      %p84 = scmp.eq.s32.totalorder %s16, 1
      %p85 = por %p83, %p84
      %p86 = scmp.ne.s32.totalorder %s78, %s81
      %p87 = scmp.eq.s32.totalorder %s16, 0
      %p88 = por %p86, %p87
      %p89 = scmp.ne.s32.totalorder %s78, %s81
      %p90 = scmp.eq.s32.totalorder %s21, 1
      %p91 = por %p89, %p90
      %p92 = scmp.ne.s32.totalorder %s81, %s82
      %p93 = scmp.eq.s32.totalorder %s21, 0
      %p94 = por %p92, %p93
      %p95 = scmp.ne.s32.totalorder %s81, %s82
      %p96 = scmp.eq.s32.totalorder %s22, 1
      %p97 = por %p95, %p96
      %p99 = scmp.ne.s32.totalorder %s82, %s98
      %p100 = scmp.eq.s32.totalorder %s22, 0
      %p101 = por %p99, %p100
      %s102 = ssub.s32 %s16, %s23
      %p103 = scmp.eq.s32.totalorder %s102, 0
      %s105 = sadd.s32 %s104, 1
      %s106 = scalar_select %p103, %s104, %s105
      %p109 = pneg %p103
      %p110 = scmp.eq.s32.totalorder %s16, 1
      %p111 = por %p109, %p110
      %p112 = scmp.ne.s32.totalorder %s104, %s107
      %p113 = scmp.eq.s32.totalorder %s16, 0
      %p114 = por %p112, %p113
      %p115 = scmp.ne.s32.totalorder %s104, %s107
      %p116 = scmp.eq.s32.totalorder %s21, 1
      %p117 = por %p115, %p116
      %p118 = scmp.ne.s32.totalorder %s107, %s108
      %p119 = scmp.eq.s32.totalorder %s21, 0
      %p120 = por %p118, %p119
      %p121 = scmp.ne.s32.totalorder %s107, %s108
      %p122 = scmp.eq.s32.totalorder %s22, 1
      %p123 = por %p121, %p122
      %p125 = scmp.ne.s32.totalorder %s108, %s124
      %p126 = scmp.eq.s32.totalorder %s22, 0
      %p127 = por %p125, %p126
      %p128 = scmp.le.s32.totalorder 1, %s16
      %p129 = scmp.lt.s32.totalorder %s16, 3
      %p130 = pnand %p128, %p129
      %p131 = pneg %p130
      // Predicated region
      $region9: #{smoothness_loss.1} parent=5 // pred_check
        _
      $region10: #{smoothness_loss.1} parent=5 // pred_check_branch
        %133 = sbr.rel (%p130) target = $region12
      $region11: #{smoothness_loss.1} parent=5 // pred_region
        %s134 = ssub.s32 %s16, 1
      $region12: #{smoothness_loss.1} parent=5 // pred_fallthru
        _
      %p135 = scmp.lt.s32.totalorder %s16, 2
      // Predicated region
      $region13: #{smoothness_loss.1} parent=5 // pred_check
        %p136 = pneg %p135
      $region14: #{smoothness_loss.1} parent=5 // pred_check_branch
        %138 = sbr.rel (%p136) target = $region16
      $region15: #{smoothness_loss.1} parent=5 // pred_region
        // Predicated region
        $region17: #{smoothness_loss.1} parent=15 // pred_check
          %p139 = pneg %p36
        $region18: #{smoothness_loss.1} parent=15 // pred_check_branch
          %141 = sbr.rel (%p139) target = $region20
        $region19: #{smoothness_loss.1} parent=15 // pred_region
          %s142 = sand.u32 %s26, 1
          %s143 = scalar_lea.sflag [#allocation3], %s142
          %s144 = sand.u32 %s26, 1
          %s145 = smul.addr %s144, 16
          %s146 = scalar_lea.vmem [#allocation2], %s145
          %s148 = ssub.s32 256, 256
          %149 = vsyncadd %s143, %s148
          %s150 = smul.addr %s16, 2
          %s151 = smul.addr %s150, 128
          %s152 = scalar_lea.hbm %s0, %s151
          %s153 = sshll.u32 %s146, 4
          %s154 = int_to_ptr.vmem [resolvable:$true] %s153
          %159 = dma.hbm_to_vmem [thread:$0]  %s152, 256, %s154, %s143, 128, 128, 8
        $region20: #{smoothness_loss.1} parent=15 // pred_fallthru
          _
        // Predicated region
        $region21: #{smoothness_loss.1} parent=15 // pred_check
          %p160 = pneg %p62
        $region22: #{smoothness_loss.1} parent=15 // pred_check_branch
          %162 = sbr.rel (%p160) target = $region24
        $region23: #{smoothness_loss.1} parent=15 // pred_region
          %s163 = sand.u32 %s52, 1
          %s164 = scalar_lea.sflag [#allocation5], %s163
          %s165 = sand.u32 %s52, 1
          %s166 = smul.addr %s165, 48
          %s167 = scalar_lea.vmem [#allocation4], %s166
          %s169 = ssub.s32 768, 768
          %170 = vsyncadd %s164, %s169
          %s171 = smul.addr %s16, 6
          %s172 = smul.addr %s171, 128
          %s173 = scalar_lea.hbm %s1, %s172
          %s174 = sshll.u32 %s167, 4
          %s175 = int_to_ptr.vmem [resolvable:$true] %s174
          %180 = dma.hbm_to_vmem [thread:$0]  %s173, 768, %s175, %s164, 128, 128, 8
        $region24: #{smoothness_loss.1} parent=15 // pred_fallthru
          _
      $region16: #{smoothness_loss.1} parent=5 // pred_fallthru
        _
      %p181 = scmp.le.s32.totalorder 1, %s16
      %p182 = scmp.lt.s32.totalorder %s16, 3
      %p183 = pnand %p181, %p182
      %p184 = pneg %p183
      // Predicated region
      $region25: #{smoothness_loss.1} parent=5 // pred_check
        _
      $region26: #{smoothness_loss.1} parent=5 // pred_check_branch
        %186 = sbr.rel (%p183) target = $region28
      $region27: #{smoothness_loss.1} parent=5 // pred_region
        %s187 = ssub.s32 %s16, 1
        %s188 = sand.u32 %s29, 1
        %s189 = scalar_lea.sflag [#allocation3], %s188
        %s190 = sand.u32 %s29, 1
        %s191 = smul.addr %s190, 16
        %s192 = scalar_lea.vmem [#allocation2], %s191
        // Predicated region
        $region29: #{smoothness_loss.1} parent=27 // pred_check
          %p193 = pneg %p42
        $region30: #{smoothness_loss.1} parent=27 // pred_check_branch
          %195 = sbr.rel (%p193) target = $region32
        $region31: #{smoothness_loss.1} parent=27 // pred_region
          %196 = dma.done %s189, 256
        $region32: #{smoothness_loss.1} parent=27 // pred_fallthru
          _
        %s197 = sand.u32 %s55, 1
        %s198 = scalar_lea.sflag [#allocation5], %s197
        %s199 = sand.u32 %s55, 1
        %s200 = smul.addr %s199, 48
        %s201 = scalar_lea.vmem [#allocation4], %s200
        // Predicated region
        $region33: #{smoothness_loss.1} parent=27 // pred_check
          %p202 = pneg %p68
        $region34: #{smoothness_loss.1} parent=27 // pred_check_branch
          %204 = sbr.rel (%p202) target = $region36
        $region35: #{smoothness_loss.1} parent=27 // pred_region
          %205 = dma.done %s198, 768
        $region36: #{smoothness_loss.1} parent=27 // pred_fallthru
          _
        %s206 = sand.u32 %s29, 1
        %s207 = scalar_lea.sflag [#allocation3], %s206
        %s208 = sand.u32 %s29, 1
        %s209 = smul.addr %s208, 16
        %s210 = scalar_lea.vmem [#allocation2], %s209
        %p211 = pneg %p42
        %p212 = pneg %p39
        %s213 = sand.u32 %s55, 1
        %s214 = scalar_lea.sflag [#allocation5], %s213
        %s215 = sand.u32 %s55, 1
        %s216 = smul.addr %s215, 48
        %s217 = scalar_lea.vmem [#allocation4], %s216
        %p218 = pneg %p68
        %p219 = pneg %p65
        %p220 = pneg %p94
        %p221 = pneg %p91
        %p222 = scmp.lt.s32.totalorder %s21, 1
        %s223 = scalar_select %p222, %s21, 1
        %s224 = scalar_lea.vmem %s2, %s223
        %p225 = pneg %p120
        %p226 = pneg %p117
        %p227 = scmp.lt.s32.totalorder %s21, 1
        %s228 = scalar_select %p227, %s21, 1
        %s229 = scalar_lea.vmem %s3, %s228
        %p230 = scmp.lt.s32.totalorder %s21, 1
        %s231 = scalar_select %p230, %s21, 1
        %s232 = scalar_lea.vmem %s2, %s231
        %p233 = scmp.lt.s32.totalorder %s21, 1
        %s234 = scalar_select %p233, %s21, 1
        %s235 = scalar_lea.vmem %s3, %s234
        %v236 = vld [vmem:[%s192] sm:$0xff]
        %v237 = vld [vmem:[%s192 + $0x8] sm:$0xff]
        %v238 = vld [vmem:[%s201] sm:$0xff]
        %v239 = vld [vmem:[%s201 + $0x8] sm:$0xff]
        %v240 = vld [vmem:[%s201 + $0x10] sm:$0xff]
        %v241 = vld [vmem:[%s201 + $0x18] sm:$0xff]
        %v242 = vld [vmem:[%s201 + $0x20] sm:$0xff]
        %v243 = vld [vmem:[%s201 + $0x28] sm:$0xff]
        %v244 = vadd.f32 %v236, %v237
        %245 = vadd.xlane.f32.xlu0 %v244
        %v246 = vpop.xlane.xlu0 %245
        %v247 = vrot.slane %v246, 4
        %v248 = vadd.f32 %v246, %v247
        %v249 = vrot.slane %v248, 2
        %v250 = vadd.f32 %v248, %v249
        %v251 = vrot.slane %v250, 1
        %v252 = vadd.f32 %v250, %v251
        %v253 = vrcp.pop 2048.0
        %v254 = vmul.f32 %v252, %v253
        %v255 = vadd.f32 %v254, 1e-07
        %v256 = vrcp.pop %v255
        %v257 = vmul.f32 %v236, %v256
        %v258 = vmul.f32 %v237, %v256
        %259 = vrot.lane.b32.xlu0 %v257, 127
        %v260 = vpop.permute.xlu0 %259
        %261 = vrot.lane.b32.xlu0 %v258, 127
        %v262 = vpop.permute.xlu0 %261
        %v263 = vrot.slane %v257, 1
        %v264 = vrot.slane %v258, 1
        %v265 = vlaneseq
        %v266 = vshrl.u32 %v265, 7
        %vm267 = vcmp.lt.s32.totalorder %v266, 7
        %v268 = vsel %vm267, %v263, %v264
        %v269 = vsel %vm267, %v264, %v263
        %270 = vrot.lane.b32.xlu0 %v238, 127
        %v271 = vpop.permute.xlu0 %270
        %272 = vrot.lane.b32.xlu0 %v239, 127
        %v273 = vpop.permute.xlu0 %272
        %274 = vrot.lane.b32.xlu0 %v240, 127
        %v275 = vpop.permute.xlu0 %274
        %276 = vrot.lane.b32.xlu0 %v241, 127
        %v277 = vpop.permute.xlu0 %276
        %278 = vrot.lane.b32.xlu0 %v242, 127
        %v279 = vpop.permute.xlu0 %278
        %280 = vrot.lane.b32.xlu0 %v243, 127
        %v281 = vpop.permute.xlu0 %280
        %v282 = vrot.slane %v238, 1
        %v283 = vrot.slane %v240, 1
        %v284 = vrot.slane %v242, 1
        %v285 = vrot.slane %v239, 1
        %v286 = vrot.slane %v241, 1
        %v287 = vrot.slane %v243, 1
        %v288 = vsel %vm267, %v282, %v285
        %v289 = vsel %vm267, %v283, %v286
        %v290 = vsel %vm267, %v284, %v287
        %v291 = vsel %vm267, %v285, %v282
        %v292 = vsel %vm267, %v286, %v283
        %v293 = vsel %vm267, %v287, %v284
        %v294 = vsub.f32 %v257, %v260
        %v295 = vsub.f32 %v258, %v262
        %v296 = vand.u32 2147483647, %v294
        %v297 = vand.u32 2147483647, %v295
        %v298 = vsub.f32 %v257, %v268
        %v299 = vsub.f32 %v258, %v269
        %v300 = vand.u32 2147483647, %v298
        %v301 = vand.u32 2147483647, %v299
        %v302 = vsub.f32 %v238, %v271
        %v303 = vsub.f32 %v239, %v273
        %v304 = vsub.f32 %v240, %v275
        %v305 = vsub.f32 %v241, %v277
        %v306 = vsub.f32 %v242, %v279
        %v307 = vsub.f32 %v243, %v281
        %v308 = vand.u32 2147483647, %v302
        %v309 = vand.u32 2147483647, %v303
        %v310 = vand.u32 2147483647, %v304
        %v311 = vand.u32 2147483647, %v305
        %v312 = vand.u32 2147483647, %v306
        %v313 = vand.u32 2147483647, %v307
        %v314 = vadd.f32 %v308, %v310
        %v315 = vadd.f32 %v314, %v312
        %v316 = vadd.f32 %v309, %v311
        %v317 = vadd.f32 %v316, %v313
        %v318 = vrcp.pop 3.0
        %v319 = vmul.f32 %v315, %v318
        %v320 = vmul.f32 %v317, %v318
        %v321 = vsub.f32 %v238, %v288
        %v322 = vsub.f32 %v239, %v291
        %v323 = vsub.f32 %v240, %v289
        %v324 = vsub.f32 %v241, %v292
        %v325 = vsub.f32 %v242, %v290
        %v326 = vsub.f32 %v243, %v293
        %v327 = vand.u32 2147483647, %v321
        %v328 = vand.u32 2147483647, %v322
        %v329 = vand.u32 2147483647, %v323
        %v330 = vand.u32 2147483647, %v324
        %v331 = vand.u32 2147483647, %v325
        %v332 = vand.u32 2147483647, %v326
        %v333 = vadd.f32 %v327, %v329
        %v334 = vadd.f32 %v333, %v331
        %v335 = vadd.f32 %v328, %v330
        %v336 = vadd.f32 %v335, %v332
        %v337 = vmul.f32 %v334, %v318
        %v338 = vmul.f32 %v336, %v318
        %v339 = vsub.f32 0.0, %v319
        %v340 = vsub.f32 0.0, %v320
        %v341 = vmul.f32 %v339, 1.442695
        %v342 = vpow.pop %v341
        %v343 = vmul.f32 %v340, 1.442695
        %v344 = vpow.pop %v343
        %v345 = vsub.f32 0.0, %v337
        %v346 = vsub.f32 0.0, %v338
        %v347 = vmul.f32 %v345, 1.442695
        %v348 = vpow.pop %v347
        %v349 = vmul.f32 %v346, 1.442695
        %v350 = vpow.pop %v349
        %v351 = vlaneseq
        %v352 = vand.u32 %v351, 127
        %v353 = vadd.s32 %v266, 8
        %vm354 = vcmp.lt.s32.totalorder %v352, 127
        %v355 = vmul.f32 %v296, %v342
        %v356 = vmul.f32 %v297, %v344
        %v357 = vsel %vm354, %v355, 0.0
        %v358 = vsel %vm354, %v356, 0.0
        %v359 = vadd.f32 %v357, %v358
        %360 = vadd.xlane.f32.xlu0 %v359
        %v361 = vpop.xlane.xlu0 %360
        %v362 = vrot.slane %v361, 4
        %v363 = vadd.f32 %v361, %v362
        %v364 = vrot.slane %v363, 2
        %v365 = vadd.f32 %v363, %v364
        %v366 = vrot.slane %v365, 1
        %v367 = vadd.f32 %v365, %v366
        %s368 = vtos %v367
        %vm369 = vcmp.lt.s32.totalorder %v266, 15
        %vm370 = vcmp.lt.s32.totalorder %v353, 15
        %v371 = vmul.f32 %v300, %v348
        %v372 = vmul.f32 %v301, %v350
        %v373 = vsel %vm369, %v371, 0.0
        %v374 = vsel %vm370, %v372, 0.0
        %v375 = vadd.f32 %v373, %v374
        %376 = vadd.xlane.f32.xlu0 %v375
        %v377 = vpop.xlane.xlu0 %376
        %v378 = vrot.slane %v377, 4
        %v379 = vadd.f32 %v377, %v378
        %v380 = vrot.slane %v379, 2
        %v381 = vadd.f32 %v379, %v380
        %v382 = vrot.slane %v381, 1
        %v383 = vadd.f32 %v381, %v382
        %s384 = vtos %v383
        %v385 = vstv %s368
        %386 = vst [vmem:[%s232] sm:$0x1] %v385
        %v387 = vstv %s384
        %388 = vst [vmem:[%s235] sm:$0x1] %v387
        %p389 = scmp.lt.s32.totalorder %s21, 1
        %s390 = scalar_select %p389, %s21, 1
        %s391 = scalar_lea.vmem %s2, %s390
        %p392 = scmp.lt.s32.totalorder %s21, 1
        %s393 = scalar_select %p392, %s21, 1
        %s394 = scalar_lea.vmem %s3, %s393
        // Predicated region
        $region37: #{smoothness_loss.1} parent=27 // pred_check
          %p395 = pneg %p91
        $region38: #{smoothness_loss.1} parent=27 // pred_check_branch
          %397 = sbr.rel (%p395) target = $region40
        $region39: #{smoothness_loss.1} parent=27 // pred_region
          _
        $region40: #{smoothness_loss.1} parent=27 // pred_fallthru
          _
        // Predicated region
        $region41: #{smoothness_loss.1} parent=27 // pred_check
          %p398 = pneg %p117
        $region42: #{smoothness_loss.1} parent=27 // pred_check_branch
          %400 = sbr.rel (%p398) target = $region44
        $region43: #{smoothness_loss.1} parent=27 // pred_region
          _
        $region44: #{smoothness_loss.1} parent=27 // pred_fallthru
          _
      $region28: #{smoothness_loss.1} parent=5 // pred_fallthru
        _
      %p401 = scmp.le.s32.totalorder 2, %s16
      // Predicated region
      $region45: #{smoothness_loss.1} parent=5 // pred_check
        %p402 = pneg %p401
      $region46: #{smoothness_loss.1} parent=5 // pred_check_branch
        %404 = sbr.rel (%p402) target = $region48
      $region47: #{smoothness_loss.1} parent=5 // pred_region
        %s405 = ssub.s32 %s16, 2
        // Predicated region
        $region49: #{smoothness_loss.1} parent=47 // pred_check
          %p406 = pneg %p97
        $region50: #{smoothness_loss.1} parent=47 // pred_check_branch
          %408 = sbr.rel (%p406) target = $region52
        $region51: #{smoothness_loss.1} parent=47 // pred_region
          %p409 = scmp.lt.s32.totalorder %s22, 1
          %s410 = scalar_select %p409, %s22, 1
          %s411 = scalar_lea.vmem %s2, %s410
        $region52: #{smoothness_loss.1} parent=47 // pred_fallthru
          _
        // Predicated region
        $region53: #{smoothness_loss.1} parent=47 // pred_check
          %p412 = pneg %p123
        $region54: #{smoothness_loss.1} parent=47 // pred_check_branch
          %414 = sbr.rel (%p412) target = $region56
        $region55: #{smoothness_loss.1} parent=47 // pred_region
          %p415 = scmp.lt.s32.totalorder %s22, 1
          %s416 = scalar_select %p415, %s22, 1
          %s417 = scalar_lea.vmem %s3, %s416
        $region56: #{smoothness_loss.1} parent=47 // pred_fallthru
          _
      $region48: #{smoothness_loss.1} parent=5 // pred_fallthru
        _
    $region6: #{smoothness_loss.1} parent=1 // loop_footer
      %s20 = sadd.s32 1, %s16
    $region7: #{smoothness_loss.1} parent=1 // loop_footer_branch
      %15 = sbr.rel target = $region3
    $region8: #{smoothness_loss.1} parent=1 // loop_exit
      _
    %418 = vsyncpa [#allocation3], 1
    %s419 = scalar_lea.sflag [#allocation3], 1
    %420 = vsyncpa %s419, 1
    %421 = vsyncpa [#allocation5], 1
    %s422 = scalar_lea.sflag [#allocation5], 1
    %423 = vsyncpa %s422, 1

</llo_original>
